<compile_context>
chip_gen: v6e
topology: v6e:2x2x1
jax: 0.10.0
libtpu: 0.0.40
codegen_flags: <defaults>
</compile_context>

<pallas_src>
import jax
import jax.numpy as jnp
from jax import lax
from jax.experimental import pallas as pl
from jax.experimental.pallas import tpu as pltpu


# Keep double-buffered in+out tiles comfortably under the default scoped VMEM
# (32 MiB on v6e/v7x defaults; v7x has only 64 MiB physical).
_VMEM_TILE_BUDGET = 8 * 1024 * 1024


def _round_up(v, m):
    return (v + m - 1) // m * m


def _prod(dims):
    n = 1
    for d in dims:
        n *= d
    return n


def _largest_divisor_leq(n, target):
    """Largest divisor of n that is <= target (target is small, <=64)."""
    for k in range(max(1, min(target, n)), 0, -1):
        if n % k == 0:
            return k
    return 1


def _tensorcores_per_chip():
    # v7x has 2 TensorCores per chip; v5e/v6e have 1.  Splitting a small
    # problem into >=2 grid steps only pays off when a second core exists.
    try:
        kind = jax.devices()[0].device_kind.lower()
    except Exception:
        return 1
    return 2 if "v7" in kind else 1


# ----------------------------------------------------------------------------
# Kernel
# ----------------------------------------------------------------------------
def _block_kernel(x_ref, w1t_ref, b1_ref, w2t_ref, b2_ref, o_ref):
    """Residual LN->Linear->GELU->LN->Linear on (KB, C, CHUNK) channel-major
    token chunks.  LN affines are already folded into w1t/b1 and w2t/b2."""
    kb = x_ref.shape[0]
    c_in = x_ref.shape[1]
    hidden = w1t_ref.shape[0]

    # Resident operands: load once, reuse for every chunk.
    w1t = w1t_ref[...]            # (H, C_in)  bf16
    b1 = b1_ref[...]              # (H, 1)     f32
    w2t = w2t_ref[...]            # (C_out, H) bf16
    b2 = b2_ref[...]              # (C_out, 1) f32

    inv_c = jnp.float32(1.0 / c_in)
    inv_h = jnp.float32(1.0 / hidden)

    def chunk_body(j, carry):
        x = x_ref[j].astype(jnp.float32)                       # (C_in, CHUNK)

        # ---- outer LayerNorm over channels (sublane axis), centered form ----
        mu = jnp.sum(x, axis=0, keepdims=True) * inv_c
        d = x - mu
        var = jnp.sum(d * d, axis=0, keepdims=True) * inv_c
        xn = d * lax.rsqrt(var + 1e-5)

        # ---- Linear1 on the MXU (LN affine folded into w1t/b1) --------------
        h = jnp.dot(w1t, xn.astype(jnp.bfloat16),
                    preferred_element_type=jnp.float32) + b1   # (H, CHUNK)

        # ---- GELU, tanh approximation (tanh runs on the idle EUP slot) ------
        h = 0.5 * h * (1.0 + jnp.tanh(
            jnp.float32(0.7978845608028654) * (h + jnp.float32(0.044715) * h * h * h)))

        # ---- inner LayerNorm over hidden channels, centered form ------------
        mu2 = jnp.sum(h, axis=0, keepdims=True) * inv_h
        dh = h - mu2
        var2 = jnp.sum(dh * dh, axis=0, keepdims=True) * inv_h
        hn = dh * lax.rsqrt(var2 + 1e-5)

        # ---- Linear2 on the MXU (inner LN affine folded into w2t/b2) --------
        y = jnp.dot(w2t, hn.astype(jnp.bfloat16),
                    preferred_element_type=jnp.float32) + b2   # (C_out, CHUNK)

        # ---- residual; lane-dense (CHUNK-wide) unmasked store ---------------
        o_ref[j] = (x + y).astype(o_ref.dtype)
        return carry

    lax.fori_loop(0, kb, chunk_body, 0)


# ----------------------------------------------------------------------------
# Parameter preparation (fold LN affines, transpose, cast to bf16 — done once)
# ----------------------------------------------------------------------------
def prepare_block_params(params):
    gn, bn, w1, b1, gh, bh, w2, b2 = [jnp.asarray(p, jnp.float32) for p in params]
    # (x_n * g + b) @ W + c  ==  x_n @ (diag(g) W) + (b @ W + c)   (exact in f32)
    w1f = w1 * gn[:, None]
    b1f = bn @ w1 + b1
    w2f = w2 * gh[:, None]
    b2f = bh @ w2 + b2
    hidden = w1.shape[1]
    c_out = w2.shape[1]
    return (w1f.T.astype(jnp.bfloat16),            # (H, C_in)   bf16
            b1f.reshape(hidden, 1),                # (H, 1)      f32
            w2f.T.astype(jnp.bfloat16),            # (C_out, H)  bf16
            b2f.reshape(c_out, 1))                 # (C_out, 1)  f32


# ----------------------------------------------------------------------------
# Packed (channel-major chunked) entry point — use this across a block stack
# ----------------------------------------------------------------------------
def block_forward_packed(x3, prepped, *, tile_m=4096):
    """x3: (K, C, CHUNK) channel-major token chunks -> same shape/layout."""
    w1t, b1c, w2t, b2c = prepped
    K, c_in, chunk = x3.shape
    hidden = w1t.shape[0]
    c_out = w2t.shape[0]
    assert c_in == c_out, "residual add requires in_channels == out_channels"
    assert chunk % 128 == 0, "token chunk must be lane-aligned (multiple of 128)"

    # ---- per-grid-step tile: kb chunks (~tile_m tokens), VMEM-budgeted ------
    itemsize = jnp.dtype(x3.dtype).itemsize
    kb_target = max(1, tile_m // chunk)
    kb_target = min(kb_target,
                    max(1, _VMEM_TILE_BUDGET // (4 * c_in * chunk * itemsize)))
    if _tensorcores_per_chip() >= 2:
        # v7x only: keep >=2 grid steps so ("parallel",) can shard across TCs.
        kb_target = min(kb_target, max(1, pl.cdiv(K, 2)))

    kb = _largest_divisor_leq(K, kb_target)
    k_pad = K
    if kb * 4 < min(kb_target, K):
        # No reasonable divisor: pad the chunk axis rather than running many
        # tiny grid steps (each step costs ~0.35us of pipeline overhead).
        steps = pl.cdiv(K, kb_target)
        kb = pl.cdiv(K, steps)
        k_pad = steps * kb
        x3 = jnp.pad(x3, ((0, k_pad - K), (0, 0), (0, 0)))
    grid = k_pad // kb

    resident = lambda shape: pl.BlockSpec(shape, lambda i: (0, 0))

    out = pl.pallas_call(
        _block_kernel,
        out_shape=jax.ShapeDtypeStruct((k_pad, c_out, chunk), x3.dtype),
        grid_spec=pltpu.PrefetchScalarGridSpec(
            num_scalar_prefetch=0,
            grid=(grid,),
            in_specs=[
                pl.BlockSpec((kb, c_in, chunk), lambda i: (i, 0, 0)),  # x tile
                resident((hidden, c_in)), resident((hidden, 1)),       # W1^T, b1
                resident((c_out, hidden)), resident((c_out, 1)),       # W2^T, b2
            ],
            out_specs=pl.BlockSpec((kb, c_out, chunk), lambda i: (i, 0, 0)),
        ),
        compiler_params=pltpu.CompilerParams(
            dimension_semantics=("parallel",)),
    )(x3, w1t, b1c, w2t, b2c)

    if k_pad != K:
        out = out[:K]
    return out


# ----------------------------------------------------------------------------
# Boundary layout conversion (do ONCE per stack, not per block)
# ----------------------------------------------------------------------------
def pack_tokens(x, *, chunk=256):
    """(..., C) token-major -> ((K, C, chunk), n_tokens). One layout copy."""
    lead = x.shape[:-1]
    c = x.shape[-1]
    n = _prod(lead)
    chunk = max(128, min(chunk, _round_up(n, 128)))
    n_pad = _round_up(n, chunk)
    x2 = x.reshape(n, c)
    if n_pad != n:
        x2 = jnp.pad(x2, ((0, n_pad - n), (0, 0)))
    # Under jit the pad + reshape + transpose fuse into a single HBM pass.
    return x2.reshape(n_pad // chunk, chunk, c).transpose(0, 2, 1), n


def unpack_tokens(y3, lead, n):
    k, c, chunk = y3.shape
    y2 = y3.transpose(0, 2, 1).reshape(k * chunk, c)[:n]
    return y2.reshape(*lead, c)


def block_forward(x, params, *, tile_m=4096, chunk=256):
    """Token-major convenience wrapper: (..., C) -> (..., C).

    For a stack of blocks, call pack_tokens()/unpack_tokens() once at the
    model boundary and chain block_forward_packed() so the layout round trip
    (the dominant HBM cost of this memory-bound block) is not paid per block.
    """
    prepped = prepare_block_params(params)
    lead = x.shape[:-1]
    x3, n = pack_tokens(x, chunk=chunk)
    y3 = block_forward_packed(x3, prepped, tile_m=tile_m)
    return unpack_tokens(y3, lead, n)


# ----------------------------------------------------------------------------
# Plain-JAX f32 reference (exact-erf GELU, matching PyTorch nn.GELU default)
# ----------------------------------------------------------------------------
def _reference(x, params):
    gn, bn, w1, b1, gh, bh, w2, b2 = params

    def ln(v, g, b):
        mu = jnp.mean(v, -1, keepdims=True)
        var = jnp.mean((v - mu) ** 2, -1, keepdims=True)
        return (v - mu) / jnp.sqrt(var + 1e-5) * g + b

    h = ln(x, gn, bn) @ w1 + b1
    h = jax.nn.gelu(h, approximate=False)
    h = ln(h, gh, bh)
    return x + (h @ w2 + b2)


# TODO(synk): KNNGrouper/PatchEmbed (data-dependent KNN gather / FPS) and the
# full ViT transformer attention stack of PointCloudEncoder are not
# reimplemented here; this kernel covers the residual LN->Linear->GELU->LN->
# Linear block.

if __name__ == "__main__":
    in_channels, hidden_dim, out_channels = 32, 64, 32

    key = jax.random.PRNGKey(0)
    (kx, k1, k2, k3, k4, kx2, kx3, kg1, kb1, kg2, kb2) = jax.random.split(key, 11)

    # Non-trivial LN affines so the weight-folding path is actually exercised.
    gamma_n = 1.0 + 0.1 * jax.random.normal(kg1, (in_channels,), jnp.float32)
    beta_n = 0.1 * jax.random.normal(kb1, (in_channels,), jnp.float32)
    w1 = jax.random.normal(k1, (in_channels, hidden_dim), jnp.float32) * 0.05
    b1 = jax.random.normal(k2, (hidden_dim,), jnp.float32) * 0.01
    gamma_h = 1.0 + 0.1 * jax.random.normal(kg2, (hidden_dim,), jnp.float32)
    beta_h = 0.1 * jax.random.normal(kb2, (hidden_dim,), jnp.float32)
    w2 = jax.random.normal(k3, (hidden_dim, out_channels), jnp.float32) * 0.05
    b2 = jax.random.normal(k4, (out_channels,), jnp.float32) * 0.01
    params = (gamma_n, beta_n, w1, b1, gamma_h, beta_h, w2, b2)

    # 1) Tiny token-major case (16 tokens padded up to one 128-lane chunk).
    x = jax.random.normal(kx, (2, 8, in_channels), jnp.float32)
    y = jax.block_until_ready(block_forward(x, params))
    y_ref = _reference(x, params)
    assert y.shape == x.shape
    # bf16 matmuls (f32 acc) + tanh-approx GELU vs f32 exact-erf reference.
    assert jnp.allclose(y, y_ref, atol=3e-2, rtol=3e-2), \
        float(jnp.max(jnp.abs(y - y_ref)))

    # 2) Chunk-aligned case through the packed channel-major API, two blocks
    #    chained with NO intermediate layout round trip.
    x_mid = jax.random.normal(kx2, (4, 640, in_channels), jnp.float32)
    prepped = prepare_block_params(params)
    x3, n_mid = pack_tokens(x_mid, chunk=256)          # single boundary copy
    y3 = block_forward_packed(x3, prepped)             # block 1 (channel-major)
    y3 = block_forward_packed(y3, prepped)             # block 2 (channel-major)
    y_mid = jax.block_until_ready(unpack_tokens(y3, x_mid.shape[:-1], n_mid))
    y_mid_ref = _reference(_reference(x_mid, params), params)
    assert y_mid.shape == x_mid.shape
    assert jnp.allclose(y_mid, y_mid_ref, atol=5e-2, rtol=5e-2), \
        float(jnp.max(jnp.abs(y_mid - y_mid_ref)))

    # 3) Unaligned larger case via the token-major wrapper (1200 -> padded).
    x_big = jax.random.normal(kx3, (3, 400, in_channels), jnp.float32)
    y_big = jax.block_until_ready(block_forward(x_big, params, tile_m=4096))
    y_big_ref = _reference(x_big, params)
    assert y_big.shape == x_big.shape
    assert jnp.allclose(y_big, y_big_ref, atol=3e-2, rtol=3e-2), \
        float(jnp.max(jnp.abs(y_big - y_big_ref)))

    print("KERNEL_OK")
</pallas_src>

<mosaic_0001>
module attributes {stable_mosaic.version = 11 : i64} {
  func.func @_block_kernel(%arg0: i32, %arg1: memref<1x32x128xf32, #tpu.memory_space<vmem>>, %arg2: memref<64x32xbf16, #tpu.memory_space<vmem>>, %arg3: memref<64x1xf32, #tpu.memory_space<vmem>>, %arg4: memref<32x64xbf16, #tpu.memory_space<vmem>>, %arg5: memref<32x1xf32, #tpu.memory_space<vmem>>, %arg6: memref<1x32x128xf32, #tpu.memory_space<vmem>>) attributes {dimension_semantics = [#tpu.dimension_semantics<parallel>], iteration_bounds = array<i64: 1>, scalar_prefetch = 0 : i64, scratch_operands = 0 : i64, tpu.core_type = #tpu.core_type<tc>, window_params = [{transform_indices = @transform_0, window_bounds = array<i64: 1, 32, 128>}, {pipeline_mode = #tpu.pipeline_mode<synchronous>, transform_indices = @transform_1, window_bounds = array<i64: 64, 32>}, {pipeline_mode = #tpu.pipeline_mode<synchronous>, transform_indices = @transform_2, window_bounds = array<i64: 64, 1>}, {pipeline_mode = #tpu.pipeline_mode<synchronous>, transform_indices = @transform_3, window_bounds = array<i64: 32, 64>}, {pipeline_mode = #tpu.pipeline_mode<synchronous>, transform_indices = @transform_4, window_bounds = array<i64: 32, 1>}, {transform_indices = @transform_5, window_bounds = array<i64: 1, 32, 128>}]} {
    %c0 = arith.constant 0 : index
    %c0_0 = arith.constant 0 : index
    %0 = vector.load %arg2[%c0, %c0_0] : memref<64x32xbf16, #tpu.memory_space<vmem>>, vector<64x32xbf16>
    %c0_1 = arith.constant 0 : index
    %c0_2 = arith.constant 0 : index
    %1 = vector.load %arg3[%c0_1, %c0_2] : memref<64x1xf32, #tpu.memory_space<vmem>>, vector<64x1xf32>
    %c0_3 = arith.constant 0 : index
    %c0_4 = arith.constant 0 : index
    %2 = vector.load %arg4[%c0_3, %c0_4] : memref<32x64xbf16, #tpu.memory_space<vmem>>, vector<32x64xbf16>
    %c0_5 = arith.constant 0 : index
    %c0_6 = arith.constant 0 : index
    %3 = vector.load %arg5[%c0_5, %c0_6] : memref<32x1xf32, #tpu.memory_space<vmem>>, vector<32x1xf32>
    %cst = arith.constant 3.125000e-02 : f32
    %cst_7 = arith.constant 1.562500e-02 : f32
    %c0_i32 = arith.constant 0 : i32
    %4 = arith.index_cast %c0_i32 : i32 to index
    %c0_8 = arith.constant 0 : index
    %c0_9 = arith.constant 0 : index
    %5 = vector.load %arg1[%4, %c0_8, %c0_9] : memref<1x32x128xf32, #tpu.memory_space<vmem>>, vector<1x32x128xf32>
    %6 = vector.shape_cast %5 : vector<1x32x128xf32> to vector<32x128xf32>
    %cst_10 = arith.constant dense<0.000000e+00> : vector<128xf32>
    %7 = vector.multi_reduction <add>, %6, %cst_10 [0] : vector<32x128xf32> to vector<128xf32>
    %8 = vector.shape_cast %7 : vector<128xf32> to vector<1x128xf32>
    %9 = vector.broadcast %cst : f32 to vector<1x128xf32>
    %10 = arith.mulf %8, %9 : vector<1x128xf32>
    %11 = vector.broadcast %10 : vector<1x128xf32> to vector<32x128xf32>
    %12 = arith.subf %6, %11 : vector<32x128xf32>
    %13 = arith.mulf %12, %12 : vector<32x128xf32>
    %cst_11 = arith.constant dense<0.000000e+00> : vector<128xf32>
    %14 = vector.multi_reduction <add>, %13, %cst_11 [0] : vector<32x128xf32> to vector<128xf32>
    %15 = vector.shape_cast %14 : vector<128xf32> to vector<1x128xf32>
    %16 = vector.broadcast %cst : f32 to vector<1x128xf32>
    %17 = arith.mulf %15, %16 : vector<1x128xf32>
    %cst_12 = arith.constant 9.99999974E-6 : f32
    %18 = vector.broadcast %cst_12 : f32 to vector<1x128xf32>
    %19 = arith.addf %17, %18 : vector<1x128xf32>
    %20 = math.rsqrt %19 : vector<1x128xf32>
    %21 = vector.broadcast %20 : vector<1x128xf32> to vector<32x128xf32>
    %22 = arith.mulf %12, %21 : vector<32x128xf32>
    %23 = arith.truncf %22 : vector<32x128xf32> to vector<32x128xbf16>
    %cst_13 = arith.constant dense<0.000000e+00> : vector<64x128xf32>
    %24 = tpu.matmul %0, %23, %cst_13 {dimension_numbers = #tpu.dot_dimension_numbers<[1], [0], [0], [1], [0, 0, 1, 1], [], []>} : vector<64x32xbf16>, vector<32x128xbf16>, vector<64x128xf32> -> vector<64x128xf32>
    %25 = vector.broadcast %1 : vector<64x1xf32> to vector<64x128xf32>
    %26 = arith.addf %24, %25 : vector<64x128xf32>
    %cst_14 = arith.constant 5.000000e-01 : f32
    %27 = vector.broadcast %cst_14 : f32 to vector<64x128xf32>
    %28 = arith.mulf %27, %26 : vector<64x128xf32>
    %cst_15 = arith.constant 4.471500e-02 : f32
    %29 = vector.broadcast %cst_15 : f32 to vector<64x128xf32>
    %30 = arith.mulf %29, %26 : vector<64x128xf32>
    %31 = arith.mulf %30, %26 : vector<64x128xf32>
    %32 = arith.mulf %31, %26 : vector<64x128xf32>
    %33 = arith.addf %26, %32 : vector<64x128xf32>
    %cst_16 = arith.constant 0.797884583 : f32
    %34 = vector.broadcast %cst_16 : f32 to vector<64x128xf32>
    %35 = arith.mulf %34, %33 : vector<64x128xf32>
    %36 = math.tanh %35 : vector<64x128xf32>
    %cst_17 = arith.constant 1.000000e+00 : f32
    %37 = vector.broadcast %cst_17 : f32 to vector<64x128xf32>
    %38 = arith.addf %37, %36 : vector<64x128xf32>
    %39 = arith.mulf %28, %38 : vector<64x128xf32>
    %cst_18 = arith.constant dense<0.000000e+00> : vector<128xf32>
    %40 = vector.multi_reduction <add>, %39, %cst_18 [0] : vector<64x128xf32> to vector<128xf32>
    %41 = vector.shape_cast %40 : vector<128xf32> to vector<1x128xf32>
    %42 = vector.broadcast %cst_7 : f32 to vector<1x128xf32>
    %43 = arith.mulf %41, %42 : vector<1x128xf32>
    %44 = vector.broadcast %43 : vector<1x128xf32> to vector<64x128xf32>
    %45 = arith.subf %39, %44 : vector<64x128xf32>
    %46 = arith.mulf %45, %45 : vector<64x128xf32>
    %cst_19 = arith.constant dense<0.000000e+00> : vector<128xf32>
    %47 = vector.multi_reduction <add>, %46, %cst_19 [0] : vector<64x128xf32> to vector<128xf32>
    %48 = vector.shape_cast %47 : vector<128xf32> to vector<1x128xf32>
    %49 = vector.broadcast %cst_7 : f32 to vector<1x128xf32>
    %50 = arith.mulf %48, %49 : vector<1x128xf32>
    %cst_20 = arith.constant 9.99999974E-6 : f32
    %51 = vector.broadcast %cst_20 : f32 to vector<1x128xf32>
    %52 = arith.addf %50, %51 : vector<1x128xf32>
    %53 = math.rsqrt %52 : vector<1x128xf32>
    %54 = vector.broadcast %53 : vector<1x128xf32> to vector<64x128xf32>
    %55 = arith.mulf %45, %54 : vector<64x128xf32>
    %56 = arith.truncf %55 : vector<64x128xf32> to vector<64x128xbf16>
    %cst_21 = arith.constant dense<0.000000e+00> : vector<32x128xf32>
    %57 = tpu.matmul %2, %56, %cst_21 {dimension_numbers = #tpu.dot_dimension_numbers<[1], [0], [0], [1], [0, 0, 1, 1], [], []>} : vector<32x64xbf16>, vector<64x128xbf16>, vector<32x128xf32> -> vector<32x128xf32>
    %58 = vector.broadcast %3 : vector<32x1xf32> to vector<32x128xf32>
    %59 = arith.addf %57, %58 : vector<32x128xf32>
    %60 = arith.addf %6, %59 : vector<32x128xf32>
    %61 = arith.index_cast %c0_i32 : i32 to index
    %c0_22 = arith.constant 0 : index
    %c0_23 = arith.constant 0 : index
    %62 = vector.load %arg6[%61, %c0_22, %c0_23] : memref<1x32x128xf32, #tpu.memory_space<vmem>>, vector<1x32x128xf32>
    %63 = vector.shape_cast %62 : vector<1x32x128xf32> to vector<32x128xf32>
    %64 = vector.shape_cast %60 : vector<32x128xf32> to vector<1x32x128xf32>
    tpu.vector_store %arg6[%61, %c0_22, %c0_23], %64 {strides = array<i32>} : memref<1x32x128xf32, #tpu.memory_space<vmem>>, vector<1x32x128xf32>,
    %c1_i32 = arith.constant 1 : i32
    return
  }
  func.func @transform_0(%arg0: i32) -> (i32, i32, i32) {
    %c0_i32 = arith.constant 0 : i32
    %c0_i32_0 = arith.constant 0 : i32
    %c0_i32_1 = arith.constant 0 : i32
    return %arg0, %c0_i32, %c0_i32_0 : i32, i32, i32
  }
  func.func @transform_1(%arg0: i32) -> (i32, i32) {
    %c0_i32 = arith.constant 0 : i32
    %c0_i32_0 = arith.constant 0 : i32
    %c0_i32_1 = arith.constant 0 : i32
    return %c0_i32, %c0_i32_0 : i32, i32
  }
  func.func @transform_2(%arg0: i32) -> (i32, i32) {
    %c0_i32 = arith.constant 0 : i32
    %c0_i32_0 = arith.constant 0 : i32
    %c0_i32_1 = arith.constant 0 : i32
    return %c0_i32, %c0_i32_0 : i32, i32
  }
  func.func @transform_3(%arg0: i32) -> (i32, i32) {
    %c0_i32 = arith.constant 0 : i32
    %c0_i32_0 = arith.constant 0 : i32
    %c0_i32_1 = arith.constant 0 : i32
    return %c0_i32, %c0_i32_0 : i32, i32
  }
  func.func @transform_4(%arg0: i32) -> (i32, i32) {
    %c0_i32 = arith.constant 0 : i32
    %c0_i32_0 = arith.constant 0 : i32
    %c0_i32_1 = arith.constant 0 : i32
    return %c0_i32, %c0_i32_0 : i32, i32
  }
  func.func @transform_5(%arg0: i32) -> (i32, i32, i32) {
    %c0_i32 = arith.constant 0 : i32
    %c0_i32_0 = arith.constant 0 : i32
    %c0_i32_1 = arith.constant 0 : i32
    return %arg0, %c0_i32, %c0_i32_0 : i32, i32, i32
  }
}

</mosaic_0001>

<llo_original>
// kernel: tpu_custom_call.1
$region0: #{tpu_custom_call.1}
  #allocation0 [shape = 'u32[]', space=smem, size = 0x4, offset = 0x4, fixed_abs, tag = 'smem constant byte address 0x4 - core index']
  #allocation1 [shape = 'u32[144,128]{1,0:T(1,128)}', space=vmem, size = 0x12000, scoped, tag = 'internal scratch']
  %s0 = inlined_call_operand.vmem [shape: f32[1,32,128], index: 0, kind: input, shape index: {}]
  %s1 = inlined_call_operand.vmem [shape: bf16[64,32], index: 1, kind: input, shape index: {}]
  %s2 = inlined_call_operand.vmem [shape: f32[64,1], index: 2, kind: input, shape index: {}]
  %s3 = inlined_call_operand.vmem [shape: bf16[32,64], index: 3, kind: input, shape index: {}]
  %s4 = inlined_call_operand.vmem [shape: f32[32,1], index: 4, kind: input, shape index: {}]
  %s5 = inlined_call_operand.hbm [shape: f32[1,32,128], index: 5, kind: output, shape index: {}]
  %s6 = sld [smem:[#allocation0]]
  $region30: #{tpu_custom_call.1} parent=0
    _
  %s8 = ssub.s32 1, %s6
  %s9 = scalar_select 0, %s8, %s6
  $region1: #{tpu_custom_call.1} parent=0
    #allocation2 [shape = 'u8[16384]{0}', space=vmem, size = 0x4000, scoped, tag = 'output window, operand 0, single buffered']
    #allocation3 [shape = 's32[1]{0}', space=sflag, size = 0x4, scoped, tag = 'scoped memory for tpu_custom_call.1']
    %10 = vsyncpa [#allocation3], 0
    // Predicated region
    $region2: #{tpu_custom_call.1} parent=1 // pred_check
      _
    $region3: #{tpu_custom_call.1} parent=1 // pred_check_branch
      %12 = sbr.rel (0) target = $region5
    $region4: #{tpu_custom_call.1} parent=1 // pred_region
      _
    $region5: #{tpu_custom_call.1} parent=1 // pred_fallthru
      _
    // Predicated region
    $region6: #{tpu_custom_call.1} parent=1 // pred_check
      _
    $region7: #{tpu_custom_call.1} parent=1 // pred_check_branch
      %14 = sbr.rel (0) target = $region9
    $region8: #{tpu_custom_call.1} parent=1 // pred_region
      _
    $region9: #{tpu_custom_call.1} parent=1 // pred_fallthru
      _
    // Predicated region
    $region10: #{tpu_custom_call.1} parent=1 // pred_check
      _
    $region11: #{tpu_custom_call.1} parent=1 // pred_check_branch
      %16 = sbr.rel (0) target = $region13
    $region12: #{tpu_custom_call.1} parent=1 // pred_region
      _
    $region13: #{tpu_custom_call.1} parent=1 // pred_fallthru
      _
    // Predicated region
    $region14: #{tpu_custom_call.1} parent=1 // pred_check
      _
    $region15: #{tpu_custom_call.1} parent=1 // pred_check_branch
      %18 = sbr.rel (0) target = $region17
    $region16: #{tpu_custom_call.1} parent=1 // pred_region
      _
    $region17: #{tpu_custom_call.1} parent=1 // pred_fallthru
      _
    // Predicated region
    $region18: #{tpu_custom_call.1} parent=1 // pred_check
      _
    $region19: #{tpu_custom_call.1} parent=1 // pred_check_branch
      %20 = sbr.rel (0) target = $region21
    $region20: #{tpu_custom_call.1} parent=1 // pred_region
      _
    $region21: #{tpu_custom_call.1} parent=1 // pred_fallthru
      _
    %v22 = vld [vmem:[%s1] sm:$0xf]
    %v23 = vld [vmem:[%s1 + $0x4] sm:$0xf]
    %v24 = vld [vmem:[%s1 + $0x8] sm:$0xf]
    %v25 = vld [vmem:[%s1 + $0xc] sm:$0xf]
    %v26 = vld [vmem:[%s1 + $0x10] sm:$0xf]
    %v27 = vld [vmem:[%s1 + $0x14] sm:$0xf]
    %v28 = vld [vmem:[%s1 + $0x18] sm:$0xf]
    %v29 = vld [vmem:[%s1 + $0x1c] sm:$0xf]
    %v30 = vld [vmem:[%s2] sm:$0xff]
    %v31 = vld [vmem:[%s2 + $0x8] sm:$0xff]
    %v32 = vld [vmem:[%s2 + $0x10] sm:$0xff]
    %v33 = vld [vmem:[%s2 + $0x18] sm:$0xff]
    %v34 = vld [vmem:[%s2 + $0x20] sm:$0xff]
    %v35 = vld [vmem:[%s2 + $0x28] sm:$0xff]
    %v36 = vld [vmem:[%s2 + $0x30] sm:$0xff]
    %v37 = vld [vmem:[%s2 + $0x38] sm:$0xff]
    %v38 = vld [vmem:[%s3] sm:$0xf]
    %v39 = vld [vmem:[%s3 + $0x4] sm:$0xf]
    %v40 = vld [vmem:[%s3 + $0x8] sm:$0xf]
    %v41 = vld [vmem:[%s3 + $0xc] sm:$0xf]
    %v42 = vld [vmem:[%s4] sm:$0xff]
    %v43 = vld [vmem:[%s4 + $0x8] sm:$0xff]
    %v44 = vld [vmem:[%s4 + $0x10] sm:$0xff]
    %v45 = vld [vmem:[%s4 + $0x18] sm:$0xff]
    %v46 = vld [vmem:[%s0] sm:$0xff]
    %v47 = vld [vmem:[%s0 + $0x8] sm:$0xff]
    %v48 = vld [vmem:[%s0 + $0x10] sm:$0xff]
    %v49 = vld [vmem:[%s0 + $0x18] sm:$0xff]
    %v50 = vadd.f32 %v46, %v47
    %v51 = vadd.f32 %v50, %v48
    %v52 = vadd.f32 %v51, %v49
    %v53 = vrot.slane %v52, 4
    %v54 = vadd.f32 %v52, %v53
    %v55 = vrot.slane %v54, 2
    %v56 = vadd.f32 %v54, %v55
    %v57 = vrot.slane %v56, 1
    %v58 = vadd.f32 %v56, %v57
    %v59 = vmul.f32 %v58, 0.03125
    %v60 = vsub.f32 %v46, %v59
    %v61 = vsub.f32 %v47, %v59
    %v62 = vsub.f32 %v48, %v59
    %v63 = vsub.f32 %v49, %v59
    %v64 = vmul.f32 %v60, %v60
    %v65 = vmul.f32 %v61, %v61
    %v66 = vmul.f32 %v62, %v62
    %v67 = vmul.f32 %v63, %v63
    %v68 = vadd.f32 %v64, %v65
    %v69 = vadd.f32 %v68, %v66
    %v70 = vadd.f32 %v69, %v67
    %v71 = vrot.slane %v70, 4
    %v72 = vadd.f32 %v70, %v71
    %v73 = vrot.slane %v72, 2
    %v74 = vadd.f32 %v72, %v73
    %v75 = vrot.slane %v74, 1
    %v76 = vadd.f32 %v74, %v75
    %v77 = vmul.f32 %v76, 0.03125
    %v78 = vadd.f32 %v77, 1e-05
    %v79 = vrsqrt.pop %v78
    %v80 = vmul.f32 %v60, %v79
    %v81 = vmul.f32 %v61, %v79
    %v82 = vmul.f32 %v62, %v79
    %v83 = vmul.f32 %v63, %v79
    %v84 = vpack.c.bf16 %v81, %v80
    %v85 = vpack.c.bf16 %v83, %v82
    %87 = vset.pattern.permute.xlu0 0
    %88 = vperm.xlu0 %87, %v30
    %v89 = vpop.permute.xlu0 %88
    %92 = vset.pattern.permute.xlu0 0
    %93 = vperm.xlu0 %92, %v31
    %v94 = vpop.permute.xlu0 %93
    %97 = vset.pattern.permute.xlu0 0
    %98 = vperm.xlu0 %97, %v32
    %v99 = vpop.permute.xlu0 %98
    %102 = vset.pattern.permute.xlu0 0
    %103 = vperm.xlu0 %102, %v33
    %v104 = vpop.permute.xlu0 %103
    %107 = vset.pattern.permute.xlu0 0
    %108 = vperm.xlu0 %107, %v34
    %v109 = vpop.permute.xlu0 %108
    %112 = vset.pattern.permute.xlu0 0
    %113 = vperm.xlu0 %112, %v35
    %v114 = vpop.permute.xlu0 %113
    %117 = vset.pattern.permute.xlu0 0
    %118 = vperm.xlu0 %117, %v36
    %v119 = vpop.permute.xlu0 %118
    %122 = vset.pattern.permute.xlu0 0
    %123 = vperm.xlu0 %122, %v37
    %v124 = vpop.permute.xlu0 %123
    %v134 = vunpack.c.l.b16 %v22
    %v135 = vunpack.c.l.b16 %v23
    %v136 = vunpack.c.l.b16 %v24
    %v137 = vunpack.c.l.b16 %v25
    %v138 = vunpack.c.l.b16 %v26
    %v139 = vunpack.c.l.b16 %v27
    %v140 = vunpack.c.l.b16 %v28
    %v141 = vunpack.c.l.b16 %v29
    %v142 = vpack.c.b16 %v135, %v134
    %v143 = vpack.c.b16 %v137, %v136
    %v144 = vpack.c.b16 %v139, %v138
    %v145 = vpack.c.b16 %v141, %v140
    %vm146 = vcmask 261120
    %v148 = vsel %vm146, %v142, 0
    %v151 = vsel %vm146, %v143, 0
    %v154 = vsel %vm146, %v144, 0
    %v157 = vsel %vm146, %v145, 0
    %159 = vmatprep.subr.bf16.mxu0 0
    %160 = vmatpush1.bf16.msra.mxu0 0
    %161 = vmatprep.subr.bf16.mxu0 0
    %162 = vmatpush1.bf16.msra.mxu0 0
    %163 = vmatprep.subr.bf16.mxu0 0
    %164 = vmatpush1.bf16.msra.mxu0 0
    %165 = vmatprep.subr.bf16.mxu0 0
    %166 = vmatpush1.bf16.msra.mxu0 0
    %167 = vmatprep.subr.bf16.mxu0 0
    %168 = vmatpush1.bf16.msra.mxu0 0
    %169 = vmatprep.subr.bf16.mxu0 0
    %170 = vmatpush1.bf16.msra.mxu0 0
    %171 = vmatprep.subr.bf16.mxu0 0
    %172 = vmatpush1.bf16.msra.mxu0 %v85
    %173 = vmatprep.subr.bf16.mxu0 0
    %174 = vmatpush1.bf16.msra.mxu0 %v84
    %175 = vmatprep.subr.bf16.mxu0 0
    %176 = vmatpush2.bf16.msra.mxu0 0
    %177 = vmatprep.subr.bf16.mxu0 0
    %178 = vmatpush2.bf16.msra.mxu0 0
    %179 = vmatprep.subr.bf16.mxu0 0
    %180 = vmatpush2.bf16.msra.mxu0 0
    %181 = vmatprep.subr.bf16.mxu0 0
    %182 = vmatpush2.bf16.msra.mxu0 0
    %183 = vmatprep.subr.bf16.mxu0 0
    %184 = vmatpush2.bf16.msra.mxu0 0
    %185 = vmatprep.subr.bf16.mxu0 0
    %186 = vmatpush2.bf16.msra.mxu0 0
    %187 = vmatprep.subr.bf16.mxu0 0
    %188 = vmatpush2.bf16.msra.mxu0 0
    %189 = vmatprep.subr.bf16.mxu0 0
    %190 = vmatpush2.bf16.msra.mxu0 0
    %191 = vmatprep.mubr.bf16.mxu0 0
    %192 = vmatmul.mubr.bf16.gmra.mxu0 %v148
    %v193 = vpop.f32.mrf.mxu0
    %v194 = vadd.f32 %v89, %v193
    %v195 = vpop.f32.mrf.mxu0
    %v196 = vpop.f32.mrf.mxu0
    %v197 = vadd.f32 %v94, %v196
    %v198 = vpop.f32.mrf.mxu0
    %199 = vmatprep.mubr.bf16.mxu0 0
    %200 = vmatmul.mubr.bf16.gmra.mxu0 %v151
    %v201 = vpop.f32.mrf.mxu0
    %v202 = vadd.f32 %v99, %v201
    %v203 = vpop.f32.mrf.mxu0
    %v204 = vpop.f32.mrf.mxu0
    %v205 = vadd.f32 %v104, %v204
    %v206 = vpop.f32.mrf.mxu0
    %207 = vmatprep.mubr.bf16.mxu0 0
    %208 = vmatmul.mubr.bf16.gmra.mxu0 %v154
    %v209 = vpop.f32.mrf.mxu0
    %v210 = vadd.f32 %v109, %v209
    %v211 = vpop.f32.mrf.mxu0
    %v212 = vpop.f32.mrf.mxu0
    %v213 = vadd.f32 %v114, %v212
    %v214 = vpop.f32.mrf.mxu0
    %215 = vmatprep.mubr.bf16.mxu0 0
    %216 = vmatmul.mubr.bf16.gmra.mxu0 %v157
    %v217 = vpop.f32.mrf.mxu0
    %v218 = vadd.f32 %v119, %v217
    %v219 = vpop.f32.mrf.mxu0
    %v220 = vpop.f32.mrf.mxu0
    %v221 = vadd.f32 %v124, %v220
    %v222 = vpop.f32.mrf.mxu0
    %223 = vdwg.mxu0
    %v224 = vmul.f32 %v194, 0.5
    %v225 = vmul.f32 %v197, 0.5
    %v226 = vmul.f32 %v202, 0.5
    %v227 = vmul.f32 %v205, 0.5
    %v228 = vmul.f32 %v210, 0.5
    %v229 = vmul.f32 %v213, 0.5
    %v230 = vmul.f32 %v218, 0.5
    %v231 = vmul.f32 %v221, 0.5
    %v232 = vmul.f32 %v194, 0.044715
    %v233 = vmul.f32 %v197, 0.044715
    %v234 = vmul.f32 %v202, 0.044715
    %v235 = vmul.f32 %v205, 0.044715
    %v236 = vmul.f32 %v210, 0.044715
    %v237 = vmul.f32 %v213, 0.044715
    %v238 = vmul.f32 %v218, 0.044715
    %v239 = vmul.f32 %v221, 0.044715
    %v240 = vmul.f32 %v232, %v194
    %v241 = vmul.f32 %v233, %v197
    %v242 = vmul.f32 %v234, %v202
    %v243 = vmul.f32 %v235, %v205
    %v244 = vmul.f32 %v236, %v210
    %v245 = vmul.f32 %v237, %v213
    %v246 = vmul.f32 %v238, %v218
    %v247 = vmul.f32 %v239, %v221
    %v248 = vmul.f32 %v240, %v194
    %v249 = vmul.f32 %v241, %v197
    %v250 = vmul.f32 %v242, %v202
    %v251 = vmul.f32 %v243, %v205
    %v252 = vmul.f32 %v244, %v210
    %v253 = vmul.f32 %v245, %v213
    %v254 = vmul.f32 %v246, %v218
    %v255 = vmul.f32 %v247, %v221
    %v256 = vadd.f32 %v194, %v248
    %v257 = vadd.f32 %v197, %v249
    %v258 = vadd.f32 %v202, %v250
    %v259 = vadd.f32 %v205, %v251
    %v260 = vadd.f32 %v210, %v252
    %v261 = vadd.f32 %v213, %v253
    %v262 = vadd.f32 %v218, %v254
    %v263 = vadd.f32 %v221, %v255
    %v264 = vmul.f32 %v256, 0.7978846
    %v265 = vmul.f32 %v257, 0.7978846
    %v266 = vmul.f32 %v258, 0.7978846
    %v267 = vmul.f32 %v259, 0.7978846
    %v268 = vmul.f32 %v260, 0.7978846
    %v269 = vmul.f32 %v261, 0.7978846
    %v270 = vmul.f32 %v262, 0.7978846
    %v271 = vmul.f32 %v263, 0.7978846
    %v272 = vtanh.pop %v264
    %v273 = vtanh.pop %v265
    %v274 = vtanh.pop %v266
    %v275 = vtanh.pop %v267
    %v276 = vtanh.pop %v268
    %v277 = vtanh.pop %v269
    %v278 = vtanh.pop %v270
    %v279 = vtanh.pop %v271
    %v280 = vadd.f32 %v272, 1.0
    %v281 = vadd.f32 %v273, 1.0
    %v282 = vadd.f32 %v274, 1.0
    %v283 = vadd.f32 %v275, 1.0
    %v284 = vadd.f32 %v276, 1.0
    %v285 = vadd.f32 %v277, 1.0
    %v286 = vadd.f32 %v278, 1.0
    %v287 = vadd.f32 %v279, 1.0
    %v288 = vmul.f32 %v224, %v280
    %v289 = vmul.f32 %v225, %v281
    %v290 = vmul.f32 %v226, %v282
    %v291 = vmul.f32 %v227, %v283
    %v292 = vmul.f32 %v228, %v284
    %v293 = vmul.f32 %v229, %v285
    %v294 = vmul.f32 %v230, %v286
    %v295 = vmul.f32 %v231, %v287
    %v296 = vadd.f32 %v288, %v289
    %v297 = vadd.f32 %v296, %v290
    %v298 = vadd.f32 %v297, %v291
    %v299 = vadd.f32 %v298, %v292
    %v300 = vadd.f32 %v299, %v293
    %v301 = vadd.f32 %v300, %v294
    %v302 = vadd.f32 %v301, %v295
    %v303 = vrot.slane %v302, 4
    %v304 = vadd.f32 %v302, %v303
    %v305 = vrot.slane %v304, 2
    %v306 = vadd.f32 %v304, %v305
    %v307 = vrot.slane %v306, 1
    %v308 = vadd.f32 %v306, %v307
    %v309 = vmul.f32 %v308, 0.015625
    %v310 = vsub.f32 %v288, %v309
    %v311 = vsub.f32 %v289, %v309
    %v312 = vsub.f32 %v290, %v309
    %v313 = vsub.f32 %v291, %v309
    %v314 = vsub.f32 %v292, %v309
    %v315 = vsub.f32 %v293, %v309
    %v316 = vsub.f32 %v294, %v309
    %v317 = vsub.f32 %v295, %v309
    %v318 = vmul.f32 %v310, %v310
    %v319 = vmul.f32 %v311, %v311
    %v320 = vmul.f32 %v312, %v312
    %v321 = vmul.f32 %v313, %v313
    %v322 = vmul.f32 %v314, %v314
    %v323 = vmul.f32 %v315, %v315
    %v324 = vmul.f32 %v316, %v316
    %v325 = vmul.f32 %v317, %v317
    %v326 = vadd.f32 %v318, %v319
    %v327 = vadd.f32 %v326, %v320
    %v328 = vadd.f32 %v327, %v321
    %v329 = vadd.f32 %v328, %v322
    %v330 = vadd.f32 %v329, %v323
    %v331 = vadd.f32 %v330, %v324
    %v332 = vadd.f32 %v331, %v325
    %v333 = vrot.slane %v332, 4
    %v334 = vadd.f32 %v332, %v333
    %v335 = vrot.slane %v334, 2
    %v336 = vadd.f32 %v334, %v335
    %v337 = vrot.slane %v336, 1
    %v338 = vadd.f32 %v336, %v337
    %v339 = vmul.f32 %v338, 0.015625
    %v340 = vadd.f32 %v339, 1e-05
    %v341 = vrsqrt.pop %v340
    %v342 = vmul.f32 %v310, %v341
    %v343 = vmul.f32 %v311, %v341
    %v344 = vmul.f32 %v312, %v341
    %v345 = vmul.f32 %v313, %v341
    %v346 = vmul.f32 %v314, %v341
    %v347 = vmul.f32 %v315, %v341
    %v348 = vmul.f32 %v316, %v341
    %v349 = vmul.f32 %v317, %v341
    %v350 = vpack.c.bf16 %v343, %v342
    %v351 = vpack.c.bf16 %v345, %v344
    %v352 = vpack.c.bf16 %v347, %v346
    %v353 = vpack.c.bf16 %v349, %v348
    %355 = vset.pattern.permute.xlu0 0
    %356 = vperm.xlu0 %355, %v42
    %v357 = vpop.permute.xlu0 %356
    %360 = vset.pattern.permute.xlu0 0
    %361 = vperm.xlu0 %360, %v43
    %v362 = vpop.permute.xlu0 %361
    %365 = vset.pattern.permute.xlu0 0
    %366 = vperm.xlu0 %365, %v44
    %v367 = vpop.permute.xlu0 %366
    %370 = vset.pattern.permute.xlu0 0
    %371 = vperm.xlu0 %370, %v45
    %v372 = vpop.permute.xlu0 %371
    %v378 = vunpack.c.l.b16 %v38
    %v379 = vunpack.c.l.b16 %v39
    %v380 = vunpack.c.l.b16 %v40
    %v381 = vunpack.c.l.b16 %v41
    %v382 = vpack.c.b16 %v379, %v378
    %v383 = vpack.c.b16 %v381, %v380
    %vm384 = vcmask 523264
    %v386 = vsel %vm384, %v382, 0
    %v389 = vsel %vm384, %v383, 0
    %391 = vmatprep.subr.bf16.mxu0 0
    %392 = vmatpush1.bf16.msra.mxu0 0
    %393 = vmatprep.subr.bf16.mxu0 0
    %394 = vmatpush1.bf16.msra.mxu0 0
    %395 = vmatprep.subr.bf16.mxu0 0
    %396 = vmatpush1.bf16.msra.mxu0 0
    %397 = vmatprep.subr.bf16.mxu0 0
    %398 = vmatpush1.bf16.msra.mxu0 0
    %399 = vmatprep.subr.bf16.mxu0 0
    %400 = vmatpush1.bf16.msra.mxu0 %v353
    %401 = vmatprep.subr.bf16.mxu0 0
    %402 = vmatpush1.bf16.msra.mxu0 %v352
    %403 = vmatprep.subr.bf16.mxu0 0
    %404 = vmatpush1.bf16.msra.mxu0 %v351
    %405 = vmatprep.subr.bf16.mxu0 0
    %406 = vmatpush1.bf16.msra.mxu0 %v350
    %407 = vmatprep.subr.bf16.mxu0 0
    %408 = vmatpush2.bf16.msra.mxu0 0
    %409 = vmatprep.subr.bf16.mxu0 0
    %410 = vmatpush2.bf16.msra.mxu0 0
    %411 = vmatprep.subr.bf16.mxu0 0
    %412 = vmatpush2.bf16.msra.mxu0 0
    %413 = vmatprep.subr.bf16.mxu0 0
    %414 = vmatpush2.bf16.msra.mxu0 0
    %415 = vmatprep.subr.bf16.mxu0 0
    %416 = vmatpush2.bf16.msra.mxu0 0
    %417 = vmatprep.subr.bf16.mxu0 0
    %418 = vmatpush2.bf16.msra.mxu0 0
    %419 = vmatprep.subr.bf16.mxu0 0
    %420 = vmatpush2.bf16.msra.mxu0 0
    %421 = vmatprep.subr.bf16.mxu0 0
    %422 = vmatpush2.bf16.msra.mxu0 0
    %423 = vmatprep.mubr.bf16.mxu0 0
    %424 = vmatmul.mubr.bf16.gmra.mxu0 %v386
    %v425 = vpop.f32.mrf.mxu0
    %v426 = vadd.f32 %v357, %v425
    %v427 = vpop.f32.mrf.mxu0
    %v428 = vpop.f32.mrf.mxu0
    %v429 = vadd.f32 %v362, %v428
    %v430 = vpop.f32.mrf.mxu0
    %431 = vmatprep.mubr.bf16.mxu0 0
    %432 = vmatmul.mubr.bf16.gmra.mxu0 %v389
    %v433 = vpop.f32.mrf.mxu0
    %v434 = vadd.f32 %v367, %v433
    %v435 = vpop.f32.mrf.mxu0
    %v436 = vpop.f32.mrf.mxu0
    %v437 = vadd.f32 %v372, %v436
    %v438 = vpop.f32.mrf.mxu0
    %439 = vdwg.mxu0
    %v440 = vadd.f32 %v46, %v426
    %v441 = vadd.f32 %v47, %v429
    %v442 = vadd.f32 %v48, %v434
    %v443 = vadd.f32 %v49, %v437
    %444 = vst [vmem:[#allocation2] sm:$0xff] %v440
    %445 = vst [vmem:[#allocation2 + $0x8] sm:$0xff] %v441
    %446 = vst [vmem:[#allocation2 + $0x10] sm:$0xff] %v442
    %447 = vst [vmem:[#allocation2 + $0x18] sm:$0xff] %v443
    // Predicated region
    $region22: #{tpu_custom_call.1} parent=1 // pred_check
      _
    $region23: #{tpu_custom_call.1} parent=1 // pred_check_branch
      %449 = sbr.rel (0) target = $region25
    $region24: #{tpu_custom_call.1} parent=1 // pred_region
      %s451 = ssub.s32 512, 512
      %452 = vsyncadd [#allocation3], %s451
      %s453 = sshll.u32 [#allocation2], 4
      %s454 = int_to_ptr.vmem [resolvable:$true] %s453
      %459 = dma.vmem_to_hbm [thread:$0]  %s454, 512, %s5, [#allocation3], 128, 128, 8
    $region25: #{tpu_custom_call.1} parent=1 // pred_fallthru
      _
    // Predicated region
    $region26: #{tpu_custom_call.1} parent=1 // pred_check
      _
    $region27: #{tpu_custom_call.1} parent=1 // pred_check_branch
      %461 = sbr.rel (0) target = $region29
    $region28: #{tpu_custom_call.1} parent=1 // pred_region
      %462 = dma.done [#allocation3], 512
    $region29: #{tpu_custom_call.1} parent=1 // pred_fallthru
      _
    %463 = vsyncpa [#allocation3], 1

</llo_original>
